<compile_context>
chip_gen: v5e
topology: v5e:2x2
jax: 0.10.0
libtpu: 0.0.40
codegen_flags: <defaults>
</compile_context>

<pallas_src>
import numpy as np
import jax
import jax.numpy as jnp
from jax.experimental import pallas as pl
from jax.experimental.pallas import tpu as pltpu


# ----------------------------------------------------------------------------
# Kernel 1: weighted softmax cross-entropy for ALL decoder layers in one step
# ----------------------------------------------------------------------------
def _make_weighted_ce_kernel(num_classes, eos_coef):
    eos = float(eos_coef)
    ncls = int(num_classes)

    def kernel(logits_ref, tc_ref, out_ref):
        """F.cross_entropy(weight=empty_weight, reduction='mean') per layer.

        logits_ref: [L, C+1, N] f32 (classes on sublanes, N=B*Q rows on lanes)
        tc_ref    : [L, 1, N]   int32 target classes
        out_ref   : [1, L]      f32 per-layer loss (lane-dense row)."""
        L = logits_ref.shape[0]
        cp = logits_ref.shape[1]
        n = logits_ref.shape[2]
        lane_iota = jax.lax.broadcasted_iota(jnp.int32, (1, L), 1)
        out = jnp.zeros((1, L), jnp.float32)
        for l in range(L):                                  # static unroll, L small
            x = logits_ref[l]                               # [Cp, N]
            tc = tc_ref[l]                                  # [1, N]
            cls_iota = jax.lax.broadcasted_iota(jnp.int32, (cp, n), 0)
            onehot = (cls_iota == tc).astype(jnp.float32)   # [Cp, N]
            m = jnp.max(x, axis=0, keepdims=True)           # [1, N]
            lse = m + jnp.log(jnp.sum(jnp.exp(x - m), axis=0, keepdims=True))
            tgt_logit = jnp.sum(x * onehot, axis=0, keepdims=True)
            # per-row class weight built in-kernel (empty_weight = 1, eos_coef on last class)
            w = jnp.where(tc == ncls, jnp.float32(eos), jnp.float32(1.0))
            nll = lse - tgt_logit
            ce_l = jnp.sum(w * nll) / jnp.sum(w)            # eos_coef > 0 => denom > 0
            out = out + jnp.where(lane_iota == l, ce_l, jnp.float32(0.0))
        out_ref[...] = out

    return kernel


def weighted_cross_entropy_batched(logits_t, target_classes, num_classes, eos_coef):
    """logits_t: [L, C+1, N] f32; target_classes: [L, 1, N] int32 -> [L] CE."""
    L, cp, n = logits_t.shape
    out = pl.pallas_call(
        _make_weighted_ce_kernel(num_classes, eos_coef),
        out_shape=jax.ShapeDtypeStruct((1, L), jnp.float32),
        grid=(1,),
        in_specs=[
            pl.BlockSpec((L, cp, n), lambda i: (0, 0, 0)),
            pl.BlockSpec((L, 1, n), lambda i: (0, 0, 0)),
        ],
        out_specs=pl.BlockSpec((1, L), lambda i: (0, 0)),
        compiler_params=pltpu.CompilerParams(
            dimension_semantics=("arbitrary",),
            vmem_limit_bytes=32 * 1024 * 1024),
    )(logits_t.astype(jnp.float32), target_classes.astype(jnp.int32))
    return out[0]


# ----------------------------------------------------------------------------
# Kernel 2: sigmoid-CE + dice loss over point samples (all layers, row-tiled)
# ----------------------------------------------------------------------------
def _make_point_mask_kernel(num_points, n_rows):
    inv_p = 1.0 / float(num_points)
    nr = int(n_rows)

    def kernel(logits_ref, labels_ref, inv_nm_ref, ce_ref, dice_ref, ce_acc, dice_acc):
        """grid = (L, R): L decoder layers ('parallel'), R row tiles ('arbitrary').

        Inputs are bf16 (upcast after load); ragged final row tile is masked
        in-kernel; per-tile partials accumulate into VMEM scratch and the
        (1,1,1) outputs are stored once at the last tile."""
        r = pl.program_id(1)
        row_tile = logits_ref.shape[1]

        @pl.when(r == 0)
        def _init():
            ce_acc[...] = jnp.zeros_like(ce_acc)
            dice_acc[...] = jnp.zeros_like(dice_acc)

        x = logits_ref[0].astype(jnp.float32)               # [row_tile, P]
        t = labels_ref[0].astype(jnp.float32)
        inv_nm = inv_nm_ref[0]

        # Mask rows beyond the true row count (ragged / out-of-bounds garbage).
        row_ids = jax.lax.broadcasted_iota(jnp.int32, (row_tile, 1), 0)
        valid = (row_ids + r * row_tile) < nr               # [row_tile, 1] bool

        # One exp + one log1p per element; sigmoid derived from the same exp
        # via an approximate EUP reciprocal.
        e = jnp.exp(-jnp.abs(x))
        softplus = jnp.log1p(e)
        bce = jnp.maximum(x, 0.0) - x * t + softplus
        bce = jnp.where(valid, bce, 0.0)
        recip = pl.reciprocal(1.0 + e, approx=True)
        p = jnp.where(x >= 0.0, recip, e * recip)           # sigmoid(x)
        p = jnp.where(valid, p, 0.0)
        tv = jnp.where(valid, t, 0.0)

        numer = 2.0 * jnp.sum(p * tv, axis=1)
        denom = jnp.sum(p, axis=1) + jnp.sum(tv, axis=1)
        dice_rows = 1.0 - (numer + 1.0) / (denom + 1.0)     # invalid rows -> exactly 0

        ce_part = jnp.sum(bce) * (inv_p * inv_nm)
        dice_part = jnp.sum(dice_rows) * inv_nm
        ce_acc[...] += jnp.full((1, 1), ce_part, dtype=jnp.float32)
        dice_acc[...] += jnp.full((1, 1), dice_part, dtype=jnp.float32)

        @pl.when(r == pl.num_programs(1) - 1)
        def _fin():
            ce_ref[...] = ce_acc[...].reshape(1, 1, 1)
            dice_ref[...] = dice_acc[...].reshape(1, 1, 1)

    return kernel


def _mask_kernel_row_tile(n_rows, p, row_tile=None):
    ALIGN = 16  # bf16 sublane packing
    if row_tile is None:
        try:
            info = pltpu.get_tpu_info()
            vmem_bytes = int(getattr(info, "vmem_capacity_bytes", 128 * 1024 * 1024))
        except Exception:  # pragma: no cover - conservative fallback
            vmem_bytes = 128 * 1024 * 1024
        # Keep the double-buffered pipeline well inside VMEM on every gen
        # (v7x has 64 MiB physical, not 128).
        budget = min(32 * 1024 * 1024, vmem_bytes // 4)
        block_cap = budget // 8                      # 2 inputs x 2 buffers, 2x headroom
        cap = block_cap // (2 * max(p, 1))           # bf16 bytes per row
        row_tile = max(ALIGN, min(1024, (cap // ALIGN) * ALIGN))
    else:
        row_tile = max(ALIGN, (row_tile // ALIGN) * ALIGN)
    if row_tile >= n_rows:
        return n_rows, 1                             # full-dim block, single tile
    return row_tile, pl.cdiv(n_rows, row_tile)


def point_mask_losses_batched(point_logits, point_labels, num_masks, num_points,
                              row_tile=None):
    """point_logits/labels: [L, N, P]  ->  ([L] loss_mask, [L] loss_dice)."""
    L, n_rows, p = point_logits.shape
    row_tile, n_tiles = _mask_kernel_row_tile(n_rows, p, row_tile)

    # bf16 inputs: halves HBM traffic of a mem-bound kernel; upcast in-kernel.
    logits_bf = point_logits.astype(jnp.bfloat16)
    labels_bf = point_labels.astype(jnp.bfloat16)
    inv_nm = jnp.asarray([1.0 / float(num_masks)], dtype=jnp.float32)

    ce, dice = pl.pallas_call(
        _make_point_mask_kernel(num_points, n_rows),
        out_shape=(jax.ShapeDtypeStruct((L, 1, 1), jnp.float32),
                   jax.ShapeDtypeStruct((L, 1, 1), jnp.float32)),
        grid=(L, n_tiles),
        in_specs=[
            pl.BlockSpec((1, row_tile, p), lambda l, r: (l, r, 0)),
            pl.BlockSpec((1, row_tile, p), lambda l, r: (l, r, 0)),
            pl.BlockSpec(memory_space=pltpu.MemorySpace.SMEM),
        ],
        out_specs=(pl.BlockSpec((1, 1, 1), lambda l, r: (l, 0, 0)),
                   pl.BlockSpec((1, 1, 1), lambda l, r: (l, 0, 0))),
        scratch_shapes=[pltpu.VMEM((1, 1), jnp.float32),
                        pltpu.VMEM((1, 1), jnp.float32)],
        compiler_params=pltpu.CompilerParams(
            dimension_semantics=("parallel", "arbitrary"),
            vmem_limit_bytes=32 * 1024 * 1024),
    )(logits_bf, labels_bf, inv_nm)
    return ce[:, 0, 0], dice[:, 0, 0]


# ----------------------------------------------------------------------------
# Plain-JAX glue (point sampling, uncertainty sampling, matching)
# ----------------------------------------------------------------------------
def calculate_uncertainty(logits):
    # logits: [R, P]  ->  -|logit|
    return -jnp.abs(logits)


def point_sample(imgs, coords):
    """Bilinear grid_sample (align_corners=False, zero padding).
    imgs: [N, H, W], coords: [N, P, 2] in [0,1] (x=width, y=height) -> [N, P]."""
    # TODO(synk): for production sizes this gather + the top_k below dominate the
    # criterion; fusing them into a Pallas gather+loss kernel (pl.ANY masks in HBM,
    # per-row DMA) is the next step but needs robust in-kernel dynamic gather.
    N, H, W = imgs.shape
    imgs_flat = imgs.reshape(N, H * W)
    x = coords[..., 0] * W - 0.5
    y = coords[..., 1] * H - 0.5
    x0 = jnp.floor(x); y0 = jnp.floor(y)
    x1 = x0 + 1.0;     y1 = y0 + 1.0
    wx1 = x - x0; wx0 = 1.0 - wx1
    wy1 = y - y0; wy0 = 1.0 - wy1

    def gather(ix, iy):
        valid = (ix >= 0) & (ix < W) & (iy >= 0) & (iy < H)
        ixc = jnp.clip(ix, 0, W - 1).astype(jnp.int32)
        iyc = jnp.clip(iy, 0, H - 1).astype(jnp.int32)
        vals = jnp.take_along_axis(imgs_flat, iyc * W + ixc, axis=1)  # batched gather
        return jnp.where(valid, vals, 0.0)

    return (gather(x0, y0) * wx0 * wy0 + gather(x1, y0) * wx1 * wy0 +
            gather(x0, y1) * wx0 * wy1 + gather(x1, y1) * wx1 * wy1)


def get_uncertain_point_coords_with_randomness(coarse_logits, num_points,
                                               oversample_ratio, importance_sample_ratio, key):
    N = coarse_logits.shape[0]
    num_sampled = int(num_points * oversample_ratio)
    k1, k2 = jax.random.split(key)
    point_coords = jax.random.uniform(k1, (N, num_sampled, 2), dtype=jnp.float32)
    point_logits = point_sample(coarse_logits, point_coords)          # [N, num_sampled]
    point_unc = calculate_uncertainty(point_logits)
    num_unc = int(importance_sample_ratio * num_points)
    num_rand = num_points - num_unc
    idx = jax.lax.top_k(point_unc, num_unc)[1]                        # [N, num_unc]
    coords_unc = jnp.take_along_axis(point_coords, idx[..., None], axis=1)
    if num_rand > 0:
        rand_coords = jax.random.uniform(k2, (N, num_rand, 2), dtype=jnp.float32)
        coords = jnp.concatenate([coords_unc, rand_coords], axis=1)
    else:
        coords = coords_unc
    return coords


def simple_matcher(outputs_without_aux, targets):
    # TODO(synk): the real HungarianMatcher is an external module; use deterministic
    # identity matching (query j <-> target j) for this synthetic kernel.
    indices = []
    for t in targets:
        g = len(t['labels'])
        indices.append((np.arange(g, dtype=np.int64), np.arange(g, dtype=np.int64)))
    return indices


# ----------------------------------------------------------------------------
# Criterion
# ----------------------------------------------------------------------------
class VideoSetCriterion:
    def __init__(self, num_classes, matcher, weight_dict, eos_coef, losses,
                 num_points, oversample_ratio, importance_sample_ratio, frames=2):
        self.num_classes = num_classes
        self.matcher = matcher
        self.weight_dict = weight_dict
        self.eos_coef = eos_coef
        self.losses = losses
        self.empty_weight = jnp.ones((num_classes + 1,), dtype=jnp.float32).at[-1].set(eos_coef)
        self.num_points = num_points
        self.oversample_ratio = oversample_ratio
        self.importance_sample_ratio = importance_sample_ratio
        self.frames = frames

    # --- losses (all decoder layers batched into single kernel launches) -----
    def _loss_labels_all(self, layer_outputs, layer_indices, targets):
        L = len(layer_outputs)
        logits = jnp.stack([o['pred_logits'] for o in layer_outputs], axis=0).astype(jnp.float32)
        _, B, Q, Cp = logits.shape
        # TODO(synk): host-side numpy index construction (matcher output is host data);
        # forces a host sync per step but matches the torch module's semantics.
        tc = np.full((L, B, Q), self.num_classes, dtype=np.int32)
        for l, indices in enumerate(layer_indices):
            for b, (src, tgt) in enumerate(indices):
                labels_b = np.asarray(targets[b]['labels'])
                tc[l, b, np.asarray(src)] = labels_b[np.asarray(tgt)]
        # lane-dense layout: classes on sublanes, B*Q rows on lanes
        logits_t = jnp.transpose(logits.reshape(L, B * Q, Cp), (0, 2, 1))      # [L, Cp, N]
        tc_dev = jnp.asarray(tc.reshape(L, 1, B * Q), dtype=jnp.int32)
        return weighted_cross_entropy_batched(
            logits_t, tc_dev, self.num_classes, self.eos_coef)                # [L]

    def _loss_masks_all(self, layer_outputs, layer_indices, targets, num_masks, key):
        src_list, tgt_list = [], []
        for outputs, indices in zip(layer_outputs, layer_indices):
            src_masks = outputs['pred_masks']                                   # [B, Q, T, H, W]
            batch_idx = np.concatenate(
                [np.full(len(np.asarray(src)), b, dtype=np.int32) for b, (src, _) in enumerate(indices)])
            src_idx = np.concatenate([np.asarray(src).astype(np.int32) for src, _ in indices])
            src_m = src_masks[jnp.asarray(batch_idx), jnp.asarray(src_idx)]     # [M, T, H, W]
            tgt_m = jnp.concatenate(
                [targets[b]['masks'][jnp.asarray(np.asarray(tgt).astype(np.int32))]
                 for b, (_, tgt) in enumerate(indices)], axis=0).astype(src_m.dtype)
            M, T, H, W = src_m.shape
            src_list.append(src_m.reshape(M * T, H, W))
            tgt_list.append(tgt_m.reshape(M * T, H, W))

        rows = src_list[0].shape[0]
        # Hungarian matching always matches every target, so per-layer matched-row
        # counts are identical; assert to catch any matcher that violates this.
        assert all(s.shape[0] == rows for s in src_list), "per-layer match counts differ"
        L = len(src_list)
        src_all = jnp.concatenate(src_list, axis=0)                              # [L*rows, H, W]
        tgt_all = jnp.concatenate(tgt_list, axis=0)

        # torch.no_grad() block: uncertainty-driven point selection + label sampling.
        # All layers sampled in one call => independent random coords per layer.
        point_coords = get_uncertain_point_coords_with_randomness(
            src_all.astype(jnp.float32), self.num_points,
            self.oversample_ratio, self.importance_sample_ratio, key)
        point_labels = jax.lax.stop_gradient(point_sample(tgt_all, point_coords))  # [L*rows, P]
        point_logits = point_sample(src_all, point_coords)                         # [L*rows, P]

        point_logits = point_logits.reshape(L, rows, self.num_points)
        point_labels = point_labels.reshape(L, rows, self.num_points)
        return point_mask_losses_batched(point_logits, point_labels, num_masks, self.num_points)

    # --- forward ------------------------------------------------------------
    def forward(self, outputs, targets, matcher_outputs=None, ret_match_result=False, key=None):
        if key is None:
            key = jax.random.PRNGKey(0)

        layer_outputs = [outputs] + list(outputs.get('aux_outputs', []))
        if matcher_outputs is not None:
            src = {k: v for k, v in matcher_outputs.items() if k != 'aux_outputs'}
            base_indices = self.matcher(src, targets)
            layer_indices = [base_indices for _ in layer_outputs]
        else:
            layer_indices = [self.matcher({k: v for k, v in lo.items() if k != 'aux_outputs'}, targets)
                             for lo in layer_outputs]

        num_masks = sum(len(t['labels']) for t in targets)
        num_masks = max(float(num_masks), 1.0)   # single-host: world_size == 1

        L = len(layer_outputs)
        losses = {}
        for loss in self.losses:
            if loss == 'labels':
                ce = self._loss_labels_all(layer_outputs, layer_indices, targets)
                losses['loss_ce'] = ce[0]
                for i in range(L - 1):
                    losses[f'loss_ce_{i}'] = ce[i + 1]
            elif loss == 'masks':
                lm, ld = self._loss_masks_all(layer_outputs, layer_indices, targets, num_masks, key)
                losses['loss_mask'] = lm[0]
                losses['loss_dice'] = ld[0]
                for i in range(L - 1):
                    losses[f'loss_mask_{i}'] = lm[i + 1]
                    losses[f'loss_dice_{i}'] = ld[i + 1]
            elif loss == 'boxes':
                # TODO(synk): loss_boxes relies on per-mask CPU loops (masks_to_boxes on 1080x1920
                # bilinear-upsampled masks) with data-dependent control flow; no clean Pallas equivalent.
                pass
            else:
                raise AssertionError(f'do you really want to compute {loss} loss?')

        if ret_match_result:
            return losses, layer_indices[-1]
        return losses


# ----------------------------------------------------------------------------
# Main
# ----------------------------------------------------------------------------
if __name__ == "__main__":
    key = jax.random.PRNGKey(0)
    B, Q, T, H, W = 2, 8, 2, 16, 16
    num_classes = 7                      # C+1 = 8
    G = 4                                # GT objects per video
    n_aux = 2                            # aux decoder layers

    k_iter = iter(jax.random.split(key, 8 + 2 * n_aux))
    pred_logits = jax.random.normal(next(k_iter), (B, Q, num_classes + 1), dtype=jnp.float32)
    pred_masks = jax.random.normal(next(k_iter), (B, Q, T, H, W), dtype=jnp.float32)
    aux_outputs = []
    for _ in range(n_aux):
        aux_outputs.append({
            'pred_logits': jax.random.normal(next(k_iter), (B, Q, num_classes + 1), dtype=jnp.float32),
            'pred_masks': jax.random.normal(next(k_iter), (B, Q, T, H, W), dtype=jnp.float32),
        })

    targets = []
    for b in range(B):
        labels = np.asarray(jax.random.randint(next(k_iter), (G,), 0, num_classes))
        masks = (jax.random.uniform(next(k_iter), (G, T, H, W)) > 0.5).astype(jnp.float32)
        targets.append({'labels': labels, 'masks': masks})

    outputs = {'pred_logits': pred_logits, 'pred_masks': pred_masks, 'aux_outputs': aux_outputs}

    criterion = VideoSetCriterion(
        num_classes=num_classes,
        matcher=simple_matcher,
        weight_dict={'loss_ce': 2.0, 'loss_mask': 5.0, 'loss_dice': 5.0},
        eos_coef=0.1,
        losses=['labels', 'masks'],
        num_points=32,
        oversample_ratio=3.0,
        importance_sample_ratio=0.75,
        frames=T,
    )

    losses = criterion.forward(outputs, targets, key=jax.random.PRNGKey(42))
    losses = {k: jax.block_until_ready(v) for k, v in losses.items()}

    expected_keys = {'loss_ce', 'loss_mask', 'loss_dice'}
    for i in range(n_aux):
        expected_keys |= {f'loss_ce_{i}', f'loss_mask_{i}', f'loss_dice_{i}'}
    assert set(losses.keys()) == expected_keys

    # --- numerical verification of the Pallas kernels ------------------------
    # 1) batched (single-step) CE kernel vs pure JAX
    Lv, Nv, Cv = 3, 16, 8
    xl = jax.random.normal(jax.random.PRNGKey(1), (Lv, Nv, Cv), dtype=jnp.float32)
    cls = jax.random.randint(jax.random.PRNGKey(2), (Lv, Nv), 0, Cv)
    ce_kernel = weighted_cross_entropy_batched(
        jnp.transpose(xl, (0, 2, 1)), cls.reshape(Lv, 1, Nv).astype(jnp.int32),
        num_classes=Cv - 1, eos_coef=0.1)
    ew = jnp.ones((Cv,), jnp.float32).at[-1].set(0.1)
    lse = jax.scipy.special.logsumexp(xl, axis=-1)
    tgt = jnp.take_along_axis(xl, cls[..., None], axis=-1)[..., 0]
    wv = ew[cls]
    ce_ref = jnp.sum(wv * (lse - tgt), axis=-1) / jnp.sum(wv, axis=-1)
    assert np.allclose(np.asarray(ce_kernel), np.asarray(ce_ref), rtol=1e-4, atol=1e-5)

    # 2) batched mask-loss kernel vs pure JAX.  row_tile=16 with 40 rows forces
    #    the multi-tile + ragged-final-tile masking path; reference uses the same
    #    bf16-rounded inputs the kernel sees.
    Rv, Pv = 40, 32
    pm_logits = jax.random.normal(jax.random.PRNGKey(3), (Lv, Rv, Pv), dtype=jnp.float32)
    pm_labels = (jax.random.uniform(jax.random.PRNGKey(4), (Lv, Rv, Pv)) > 0.5).astype(jnp.float32)
    nm = 8.0
    km, kd = point_mask_losses_batched(pm_logits, pm_labels, nm, Pv, row_tile=16)
    lb = pm_logits.astype(jnp.bfloat16).astype(jnp.float32)
    tb = pm_labels                                             # {0,1} exact in bf16
    bce = jnp.maximum(lb, 0) - lb * tb + jnp.log1p(jnp.exp(-jnp.abs(lb)))
    rm = jnp.sum(jnp.mean(bce, axis=2), axis=1) / nm
    pr = jax.nn.sigmoid(lb)
    rd = jnp.sum(1 - (2 * jnp.sum(pr * tb, 2) + 1) /
                 (jnp.sum(pr, 2) + jnp.sum(tb, 2) + 1), axis=1) / nm
    assert np.allclose(np.asarray(km), np.asarray(rm), rtol=1e-3, atol=1e-5)
    assert np.allclose(np.asarray(kd), np.asarray(rd), rtol=1e-2, atol=1e-4)   # approx rcp

    # 3) end-to-end check of the main-layer classification loss
    tc0 = np.full((B, Q), num_classes, dtype=np.int32)
    for b in range(B):
        tc0[b, :G] = np.asarray(targets[b]['labels'])
    logits0 = pred_logits.reshape(B * Q, num_classes + 1)
    tc0 = jnp.asarray(tc0.reshape(B * Q))
    lse0 = jax.scipy.special.logsumexp(logits0, axis=-1)
    tgt0 = jnp.take_along_axis(logits0, tc0[:, None], axis=1)[:, 0]
    w0 = criterion.empty_weight[tc0]
    ce0_ref = jnp.sum(w0 * (lse0 - tgt0)) / jnp.sum(w0)
    assert np.allclose(np.asarray(losses['loss_ce']), np.asarray(ce0_ref), rtol=1e-4, atol=1e-5)

    assert all(np.isfinite(np.asarray(v)) for v in losses.values())
    print("KERNEL_OK")
</pallas_src>

<mosaic_0001>
module attributes {stable_mosaic.version = 11 : i64} {
  func.func @kernel(%arg0: i32, %arg1: memref<3x8x16xf32, #tpu.memory_space<vmem>>, %arg2: memref<3x1x16xi32, #tpu.memory_space<vmem>>, %arg3: memref<1x3xf32, #tpu.memory_space<vmem>>) attributes {dimension_semantics = [#tpu.dimension_semantics<arbitrary>], iteration_bounds = array<i64: 1>, scalar_prefetch = 0 : i64, scratch_operands = 0 : i64, tpu.core_type = #tpu.core_type<tc>, window_params = [{pipeline_mode = #tpu.pipeline_mode<synchronous>, transform_indices = @transform_0, window_bounds = array<i64: 3, 8, 16>}, {pipeline_mode = #tpu.pipeline_mode<synchronous>, transform_indices = @transform_1, window_bounds = array<i64: 3, 1, 16>}, {pipeline_mode = #tpu.pipeline_mode<synchronous>, transform_indices = @transform_2, window_bounds = array<i64: 1, 3>}]} {
    %0 = tpu.iota {dimensions = array<i32: 1>} : vector<1x3xi32>
    %cst = arith.constant 0.000000e+00 : f32
    %1 = vector.broadcast %cst : f32 to vector<1x3xf32>
    %c0 = arith.constant 0 : index
    %c0_0 = arith.constant 0 : index
    %c0_1 = arith.constant 0 : index
    %2 = vector.load %arg1[%c0, %c0_0, %c0_1] : memref<3x8x16xf32, #tpu.memory_space<vmem>>, vector<1x8x16xf32>
    %3 = vector.shape_cast %2 : vector<1x8x16xf32> to vector<8x16xf32>
    %c0_2 = arith.constant 0 : index
    %c0_3 = arith.constant 0 : index
    %c0_4 = arith.constant 0 : index
    %4 = vector.load %arg2[%c0_2, %c0_3, %c0_4] : memref<3x1x16xi32, #tpu.memory_space<vmem>>, vector<1x1x16xi32>
    %5 = vector.shape_cast %4 : vector<1x1x16xi32> to vector<1x16xi32>
    %6 = tpu.iota {dimensions = array<i32: 0>} : vector<8x16xi32>
    %7 = vector.broadcast %5 : vector<1x16xi32> to vector<8x16xi32>
    %8 = arith.cmpi eq, %6, %7 : vector<8x16xi32>
    %9 = arith.extui %8 : vector<8x16xi1> to vector<8x16xi32>
    %10 = arith.sitofp %9 : vector<8x16xi32> to vector<8x16xf32>
    %cst_5 = arith.constant dense<0xFF800000> : vector<16xf32>
    %11 = vector.multi_reduction <maximumf>, %3, %cst_5 [0] : vector<8x16xf32> to vector<16xf32>
    %12 = vector.shape_cast %11 : vector<16xf32> to vector<1x16xf32>
    %13 = vector.broadcast %12 : vector<1x16xf32> to vector<8x16xf32>
    %14 = arith.subf %3, %13 : vector<8x16xf32>
    %15 = math.exp %14 : vector<8x16xf32>
    %cst_6 = arith.constant dense<0.000000e+00> : vector<16xf32>
    %16 = vector.multi_reduction <add>, %15, %cst_6 [0] : vector<8x16xf32> to vector<16xf32>
    %17 = vector.shape_cast %16 : vector<16xf32> to vector<1x16xf32>
    %18 = math.log %17 : vector<1x16xf32>
    %19 = arith.addf %12, %18 : vector<1x16xf32>
    %20 = arith.mulf %3, %10 : vector<8x16xf32>
    %cst_7 = arith.constant dense<0.000000e+00> : vector<16xf32>
    %21 = vector.multi_reduction <add>, %20, %cst_7 [0] : vector<8x16xf32> to vector<16xf32>
    %22 = vector.shape_cast %21 : vector<16xf32> to vector<1x16xf32>
    %c7_i32 = arith.constant 7 : i32
    %23 = vector.broadcast %c7_i32 : i32 to vector<1x16xi32>
    %24 = arith.cmpi eq, %5, %23 : vector<1x16xi32>
    %cst_8 = arith.constant 1.000000e-01 : f32
    %cst_9 = arith.constant 1.000000e+00 : f32
    %25 = vector.broadcast %cst_8 : f32 to vector<1x16xf32>
    %26 = vector.broadcast %cst_9 : f32 to vector<1x16xf32>
    %27 = arith.select %24, %25, %26 : vector<1x16xi1>, vector<1x16xf32>
    %28 = arith.subf %19, %22 : vector<1x16xf32>
    %29 = arith.mulf %27, %28 : vector<1x16xf32>
    %30 = vector.shape_cast %29 : vector<1x16xf32> to vector<1x1x16xf32>
    %cst_10 = arith.constant dense<0.000000e+00> : vector<1xf32>
    %31 = vector.multi_reduction <add>, %30, %cst_10 [1, 2] : vector<1x1x16xf32> to vector<1xf32>
    %32 = vector.shape_cast %31 : vector<1xf32> to vector<1x1x1xf32>
    %33 = vector.extract %32[0, 0, 0] : f32 from vector<1x1x1xf32>
    %34 = vector.shape_cast %27 : vector<1x16xf32> to vector<1x1x16xf32>
    %cst_11 = arith.constant dense<0.000000e+00> : vector<1xf32>
    %35 = vector.multi_reduction <add>, %34, %cst_11 [1, 2] : vector<1x1x16xf32> to vector<1xf32>
    %36 = vector.shape_cast %35 : vector<1xf32> to vector<1x1x1xf32>
    %37 = vector.extract %36[0, 0, 0] : f32 from vector<1x1x1xf32>
    %38 = arith.divf %33, %37 : f32
    %c0_i32 = arith.constant 0 : i32
    %39 = vector.broadcast %c0_i32 : i32 to vector<1x3xi32>
    %40 = arith.cmpi eq, %0, %39 : vector<1x3xi32>
    %cst_12 = arith.constant 0.000000e+00 : f32
    %41 = vector.broadcast %38 : f32 to vector<1x3xf32>
    %42 = vector.broadcast %cst_12 : f32 to vector<1x3xf32>
    %43 = arith.select %40, %41, %42 : vector<1x3xi1>, vector<1x3xf32>
    %44 = arith.addf %1, %43 : vector<1x3xf32>
    %c1 = arith.constant 1 : index
    %c0_13 = arith.constant 0 : index
    %c0_14 = arith.constant 0 : index
    %45 = vector.load %arg1[%c1, %c0_13, %c0_14] : memref<3x8x16xf32, #tpu.memory_space<vmem>>, vector<1x8x16xf32>
    %46 = vector.shape_cast %45 : vector<1x8x16xf32> to vector<8x16xf32>
    %c1_15 = arith.constant 1 : index
    %c0_16 = arith.constant 0 : index
    %c0_17 = arith.constant 0 : index
    %47 = vector.load %arg2[%c1_15, %c0_16, %c0_17] : memref<3x1x16xi32, #tpu.memory_space<vmem>>, vector<1x1x16xi32>
    %48 = vector.shape_cast %47 : vector<1x1x16xi32> to vector<1x16xi32>
    %49 = tpu.iota {dimensions = array<i32: 0>} : vector<8x16xi32>
    %50 = vector.broadcast %48 : vector<1x16xi32> to vector<8x16xi32>
    %51 = arith.cmpi eq, %49, %50 : vector<8x16xi32>
    %52 = arith.extui %51 : vector<8x16xi1> to vector<8x16xi32>
    %53 = arith.sitofp %52 : vector<8x16xi32> to vector<8x16xf32>
    %cst_18 = arith.constant dense<0xFF800000> : vector<16xf32>
    %54 = vector.multi_reduction <maximumf>, %46, %cst_18 [0] : vector<8x16xf32> to vector<16xf32>
    %55 = vector.shape_cast %54 : vector<16xf32> to vector<1x16xf32>
    %56 = vector.broadcast %55 : vector<1x16xf32> to vector<8x16xf32>
    %57 = arith.subf %46, %56 : vector<8x16xf32>
    %58 = math.exp %57 : vector<8x16xf32>
    %cst_19 = arith.constant dense<0.000000e+00> : vector<16xf32>
    %59 = vector.multi_reduction <add>, %58, %cst_19 [0] : vector<8x16xf32> to vector<16xf32>
    %60 = vector.shape_cast %59 : vector<16xf32> to vector<1x16xf32>
    %61 = math.log %60 : vector<1x16xf32>
    %62 = arith.addf %55, %61 : vector<1x16xf32>
    %63 = arith.mulf %46, %53 : vector<8x16xf32>
    %cst_20 = arith.constant dense<0.000000e+00> : vector<16xf32>
    %64 = vector.multi_reduction <add>, %63, %cst_20 [0] : vector<8x16xf32> to vector<16xf32>
    %65 = vector.shape_cast %64 : vector<16xf32> to vector<1x16xf32>
    %c7_i32_21 = arith.constant 7 : i32
    %66 = vector.broadcast %c7_i32_21 : i32 to vector<1x16xi32>
    %67 = arith.cmpi eq, %48, %66 : vector<1x16xi32>
    %cst_22 = arith.constant 1.000000e-01 : f32
    %cst_23 = arith.constant 1.000000e+00 : f32
    %68 = vector.broadcast %cst_22 : f32 to vector<1x16xf32>
    %69 = vector.broadcast %cst_23 : f32 to vector<1x16xf32>
    %70 = arith.select %67, %68, %69 : vector<1x16xi1>, vector<1x16xf32>
    %71 = arith.subf %62, %65 : vector<1x16xf32>
    %72 = arith.mulf %70, %71 : vector<1x16xf32>
    %73 = vector.shape_cast %72 : vector<1x16xf32> to vector<1x1x16xf32>
    %cst_24 = arith.constant dense<0.000000e+00> : vector<1xf32>
    %74 = vector.multi_reduction <add>, %73, %cst_24 [1, 2] : vector<1x1x16xf32> to vector<1xf32>
    %75 = vector.shape_cast %74 : vector<1xf32> to vector<1x1x1xf32>
    %76 = vector.extract %75[0, 0, 0] : f32 from vector<1x1x1xf32>
    %77 = vector.shape_cast %70 : vector<1x16xf32> to vector<1x1x16xf32>
    %cst_25 = arith.constant dense<0.000000e+00> : vector<1xf32>
    %78 = vector.multi_reduction <add>, %77, %cst_25 [1, 2] : vector<1x1x16xf32> to vector<1xf32>
    %79 = vector.shape_cast %78 : vector<1xf32> to vector<1x1x1xf32>
    %80 = vector.extract %79[0, 0, 0] : f32 from vector<1x1x1xf32>
    %81 = arith.divf %76, %80 : f32
    %c1_i32 = arith.constant 1 : i32
    %82 = vector.broadcast %c1_i32 : i32 to vector<1x3xi32>
    %83 = arith.cmpi eq, %0, %82 : vector<1x3xi32>
    %cst_26 = arith.constant 0.000000e+00 : f32
    %84 = vector.broadcast %81 : f32 to vector<1x3xf32>
    %85 = vector.broadcast %cst_26 : f32 to vector<1x3xf32>
    %86 = arith.select %83, %84, %85 : vector<1x3xi1>, vector<1x3xf32>
    %87 = arith.addf %44, %86 : vector<1x3xf32>
    %c2 = arith.constant 2 : index
    %c0_27 = arith.constant 0 : index
    %c0_28 = arith.constant 0 : index
    %88 = vector.load %arg1[%c2, %c0_27, %c0_28] : memref<3x8x16xf32, #tpu.memory_space<vmem>>, vector<1x8x16xf32>
    %89 = vector.shape_cast %88 : vector<1x8x16xf32> to vector<8x16xf32>
    %c2_29 = arith.constant 2 : index
    %c0_30 = arith.constant 0 : index
    %c0_31 = arith.constant 0 : index
    %90 = vector.load %arg2[%c2_29, %c0_30, %c0_31] : memref<3x1x16xi32, #tpu.memory_space<vmem>>, vector<1x1x16xi32>
    %91 = vector.shape_cast %90 : vector<1x1x16xi32> to vector<1x16xi32>
    %92 = tpu.iota {dimensions = array<i32: 0>} : vector<8x16xi32>
    %93 = vector.broadcast %91 : vector<1x16xi32> to vector<8x16xi32>
    %94 = arith.cmpi eq, %92, %93 : vector<8x16xi32>
    %95 = arith.extui %94 : vector<8x16xi1> to vector<8x16xi32>
    %96 = arith.sitofp %95 : vector<8x16xi32> to vector<8x16xf32>
    %cst_32 = arith.constant dense<0xFF800000> : vector<16xf32>
    %97 = vector.multi_reduction <maximumf>, %89, %cst_32 [0] : vector<8x16xf32> to vector<16xf32>
    %98 = vector.shape_cast %97 : vector<16xf32> to vector<1x16xf32>
    %99 = vector.broadcast %98 : vector<1x16xf32> to vector<8x16xf32>
    %100 = arith.subf %89, %99 : vector<8x16xf32>
    %101 = math.exp %100 : vector<8x16xf32>
    %cst_33 = arith.constant dense<0.000000e+00> : vector<16xf32>
    %102 = vector.multi_reduction <add>, %101, %cst_33 [0] : vector<8x16xf32> to vector<16xf32>
    %103 = vector.shape_cast %102 : vector<16xf32> to vector<1x16xf32>
    %104 = math.log %103 : vector<1x16xf32>
    %105 = arith.addf %98, %104 : vector<1x16xf32>
    %106 = arith.mulf %89, %96 : vector<8x16xf32>
    %cst_34 = arith.constant dense<0.000000e+00> : vector<16xf32>
    %107 = vector.multi_reduction <add>, %106, %cst_34 [0] : vector<8x16xf32> to vector<16xf32>
    %108 = vector.shape_cast %107 : vector<16xf32> to vector<1x16xf32>
    %c7_i32_35 = arith.constant 7 : i32
    %109 = vector.broadcast %c7_i32_35 : i32 to vector<1x16xi32>
    %110 = arith.cmpi eq, %91, %109 : vector<1x16xi32>
    %cst_36 = arith.constant 1.000000e-01 : f32
    %cst_37 = arith.constant 1.000000e+00 : f32
    %111 = vector.broadcast %cst_36 : f32 to vector<1x16xf32>
    %112 = vector.broadcast %cst_37 : f32 to vector<1x16xf32>
    %113 = arith.select %110, %111, %112 : vector<1x16xi1>, vector<1x16xf32>
    %114 = arith.subf %105, %108 : vector<1x16xf32>
    %115 = arith.mulf %113, %114 : vector<1x16xf32>
    %116 = vector.shape_cast %115 : vector<1x16xf32> to vector<1x1x16xf32>
    %cst_38 = arith.constant dense<0.000000e+00> : vector<1xf32>
    %117 = vector.multi_reduction <add>, %116, %cst_38 [1, 2] : vector<1x1x16xf32> to vector<1xf32>
    %118 = vector.shape_cast %117 : vector<1xf32> to vector<1x1x1xf32>
    %119 = vector.extract %118[0, 0, 0] : f32 from vector<1x1x1xf32>
    %120 = vector.shape_cast %113 : vector<1x16xf32> to vector<1x1x16xf32>
    %cst_39 = arith.constant dense<0.000000e+00> : vector<1xf32>
    %121 = vector.multi_reduction <add>, %120, %cst_39 [1, 2] : vector<1x1x16xf32> to vector<1xf32>
    %122 = vector.shape_cast %121 : vector<1xf32> to vector<1x1x1xf32>
    %123 = vector.extract %122[0, 0, 0] : f32 from vector<1x1x1xf32>
    %124 = arith.divf %119, %123 : f32
    %c2_i32 = arith.constant 2 : i32
    %125 = vector.broadcast %c2_i32 : i32 to vector<1x3xi32>
    %126 = arith.cmpi eq, %0, %125 : vector<1x3xi32>
    %cst_40 = arith.constant 0.000000e+00 : f32
    %127 = vector.broadcast %124 : f32 to vector<1x3xf32>
    %128 = vector.broadcast %cst_40 : f32 to vector<1x3xf32>
    %129 = arith.select %126, %127, %128 : vector<1x3xi1>, vector<1x3xf32>
    %130 = arith.addf %87, %129 : vector<1x3xf32>
    %c0_41 = arith.constant 0 : index
    %c0_42 = arith.constant 0 : index
    %131 = vector.load %arg3[%c0_41, %c0_42] : memref<1x3xf32, #tpu.memory_space<vmem>>, vector<1x3xf32>
    tpu.vector_store %arg3[%c0_41, %c0_42], %130 {strides = array<i32>} : memref<1x3xf32, #tpu.memory_space<vmem>>, vector<1x3xf32>,
    return
  }
  func.func @transform_0(%arg0: i32) -> (i32, i32, i32) {
    %c0_i32 = arith.constant 0 : i32
    %c0_i32_0 = arith.constant 0 : i32
    %c0_i32_1 = arith.constant 0 : i32
    %c0_i32_2 = arith.constant 0 : i32
    return %c0_i32, %c0_i32_0, %c0_i32_1 : i32, i32, i32
  }
  func.func @transform_1(%arg0: i32) -> (i32, i32, i32) {
    %c0_i32 = arith.constant 0 : i32
    %c0_i32_0 = arith.constant 0 : i32
    %c0_i32_1 = arith.constant 0 : i32
    %c0_i32_2 = arith.constant 0 : i32
    return %c0_i32, %c0_i32_0, %c0_i32_1 : i32, i32, i32
  }
  func.func @transform_2(%arg0: i32) -> (i32, i32) {
    %c0_i32 = arith.constant 0 : i32
    %c0_i32_0 = arith.constant 0 : i32
    %c0_i32_1 = arith.constant 0 : i32
    return %c0_i32, %c0_i32_0 : i32, i32
  }
}

</mosaic_0001>

<llo_original>
// kernel: tpu_custom_call.1
$region0: #{tpu_custom_call.1}
  #allocation0 [shape = 'u32[]', space=smem, size = 0x4, offset = 0x4, fixed_abs, tag = 'smem constant byte address 0x4 - core index']
  #allocation1 [shape = 'u32[72,128]{1,0:T(1,128)}', space=vmem, size = 0x9000, scoped, tag = 'internal scratch']
  %s0 = inlined_call_operand.hbm [shape: f32[3,8,16], index: 0, kind: input, shape index: {}]
  %s1 = inlined_call_operand.hbm [shape: s32[3,1,16], index: 1, kind: input, shape index: {}]
  %s2 = inlined_call_operand.hbm [shape: f32[1,3], index: 2, kind: output, shape index: {}]
  %s3 = sld [smem:[#allocation0]]
  $region26: #{tpu_custom_call.1} parent=0
    _
  %s5 = ssub.s32 1, %s3
  %s6 = scalar_select 0, %s5, %s3
  $region1: #{tpu_custom_call.1} parent=0
    #allocation2 [shape = 'u8[12288]{0}', space=vmem, size = 0x3000, scoped, tag = 'input window, operand 0, single buffered']
    #allocation3 [shape = 's32[1]{0}', space=sflag, size = 0x4, scoped, tag = 'scoped memory for tpu_custom_call.1']
    #allocation4 [shape = 's32[1]{0}', space=sflag, size = 0x4, scoped, tag = 'scoped memory for tpu_custom_call.1']
    #allocation5 [shape = 'u8[1536]{0}', space=vmem, size = 0x800, scoped, tag = 'input window, operand 1, single buffered']
    #allocation6 [shape = 's32[1]{0}', space=sflag, size = 0x4, scoped, tag = 'scoped memory for tpu_custom_call.1']
    #allocation7 [shape = 'u8[512]{0}', space=vmem, size = 0x400, scoped, tag = 'output window, operand 0, single buffered']
    %7 = vsyncpa [#allocation3], 0
    %8 = vsyncpa [#allocation6], 0
    %9 = vsyncpa [#allocation4], 0
    // Predicated region
    $region2: #{tpu_custom_call.1} parent=1 // pred_check
      _
    $region3: #{tpu_custom_call.1} parent=1 // pred_check_branch
      %11 = sbr.rel (0) target = $region5
    $region4: #{tpu_custom_call.1} parent=1 // pred_region
      %13 = vsyncadd [#allocation3], 0
      %s14 = sshll.u32 %s0, 4
      %s15 = int_to_ptr.hbm [resolvable:$true] %s14
      %s16 = sshll.u32 [#allocation2], 4
      %s17 = int_to_ptr.vmem [resolvable:$true] %s16
      %22 = dma.hbm_to_vmem [thread:$0]  %s15, 384, %s17, [#allocation3], 128, 128, 8
    $region5: #{tpu_custom_call.1} parent=1 // pred_fallthru
      _
    // Predicated region
    $region6: #{tpu_custom_call.1} parent=1 // pred_check
      _
    $region7: #{tpu_custom_call.1} parent=1 // pred_check_branch
      %24 = sbr.rel (0) target = $region9
    $region8: #{tpu_custom_call.1} parent=1 // pred_region
      %26 = vsyncadd [#allocation6], 0
      %s27 = sshll.u32 %s1, 4
      %s28 = int_to_ptr.hbm [resolvable:$true] %s27
      %s29 = sshll.u32 [#allocation5], 4
      %s30 = int_to_ptr.vmem [resolvable:$true] %s29
      %35 = dma.hbm_to_vmem [thread:$0]  %s28, 48, %s30, [#allocation6], 16, 16, 1
    $region9: #{tpu_custom_call.1} parent=1 // pred_fallthru
      _
    // Predicated region
    $region10: #{tpu_custom_call.1} parent=1 // pred_check
      _
    $region11: #{tpu_custom_call.1} parent=1 // pred_check_branch
      %37 = sbr.rel (0) target = $region13
    $region12: #{tpu_custom_call.1} parent=1 // pred_region
      %39 = dma.done [#allocation3], 384
    $region13: #{tpu_custom_call.1} parent=1 // pred_fallthru
      _
    // Predicated region
    $region14: #{tpu_custom_call.1} parent=1 // pred_check
      _
    $region15: #{tpu_custom_call.1} parent=1 // pred_check_branch
      %41 = sbr.rel (0) target = $region17
    $region16: #{tpu_custom_call.1} parent=1 // pred_region
      %43 = dma.done [#allocation6], 48
    $region17: #{tpu_custom_call.1} parent=1 // pred_fallthru
      _
    %v44 = vlaneseq
    %v45 = vand.u32 %v44, 127
    %v46 = vld [vmem:[#allocation2] sm:$0xff]
    %v47 = vld [vmem:[#allocation5] sm:$0x1]
    %v48 = vlaneseq
    %v49 = vshrl.u32 %v48, 7
    %v50 = vperm.slane %v47, 0
    %vm51 = vcmp.eq.s32.totalorder %v49, %v50
    %v52 = vsel %vm51, 1, 0
    %v53 = vcvt.s32.f32 %v52
    %vm54 = vcmask 130048
    %v55 = vsel %vm54, %v46, -inf
    %v56 = vrot.slane %v55, 4
    %v57 = vmax.f32 %v55, %v56
    %v58 = vrot.slane %v57, 2
    %v59 = vmax.f32 %v57, %v58
    %v60 = vrot.slane %v59, 1
    %v61 = vmax.f32 %v59, %v60
    %v62 = vsub.f32 %v46, %v61
    %v63 = vmul.f32 %v62, 1.442695
    %v64 = vpow.pop %v63
    %v65 = vsel %vm54, %v64, 0.0
    %v66 = vrot.slane %v65, 4
    %v67 = vadd.f32 %v65, %v66
    %v68 = vrot.slane %v67, 2
    %v69 = vadd.f32 %v67, %v68
    %v70 = vrot.slane %v69, 1
    %v71 = vadd.f32 %v69, %v70
    %v72 = vlog2.pop %v71
    %v73 = vmul.f32 %v72, 0.6931472
    %v74 = vadd.f32 %v61, %v73
    %v75 = vmul.f32 %v46, %v53
    %v76 = vsel %vm54, %v75, 0.0
    %v77 = vrot.slane %v76, 4
    %v78 = vadd.f32 %v76, %v77
    %v79 = vrot.slane %v78, 2
    %v80 = vadd.f32 %v78, %v79
    %v81 = vrot.slane %v80, 1
    %v82 = vadd.f32 %v80, %v81
    %vm83 = vcmp.eq.s32.totalorder %v47, 7
    %v84 = vsel %vm83, 0.1, 1.0
    %v85 = vsub.f32 %v74, %v82
    %v86 = vmul.f32 %v84, %v85
    %vm87 = vcmask 122880
    %v88 = vsel %vm87, %v86, 0.0
    %89 = vadd.xlane.f32.xlu0 %v88
    %v90 = vpop.xlane.xlu0 %89
    %v91 = vrot.slane %v90, 4
    %v92 = vadd.f32 %v90, %v91
    %v93 = vrot.slane %v92, 2
    %v94 = vadd.f32 %v92, %v93
    %v95 = vrot.slane %v94, 1
    %v96 = vadd.f32 %v94, %v95
    %s97 = vtos %v96
    %v98 = vsel %vm87, %v84, 0.0
    %99 = vadd.xlane.f32.xlu0 %v98
    %v100 = vpop.xlane.xlu0 %99
    %v101 = vrot.slane %v100, 4
    %v102 = vadd.f32 %v100, %v101
    %v103 = vrot.slane %v102, 2
    %v104 = vadd.f32 %v102, %v103
    %v105 = vrot.slane %v104, 1
    %v106 = vadd.f32 %v104, %v105
    %s107 = vtos %v106
    %v108 = vstv %s107
    %v109 = vrcp.pop %v108
    %v110 = vmul.f32 %v108, %v109
    %v111 = vsub.f32 1.0, %v110
    %v112 = vmul.f32 %v109, %v111
    %v113 = vadd.f32 %v109, %v112
    %vm114 = vweird.f32 %v108
    %vm115 = vweird.f32 %v109
    %vm116 = vmor %vm114, %vm115
    %v117 = vsel %vm116, %v109, %v113
    %v118 = vand.u32 2147483647, %v108
    %vm119 = vcmp.eq.f32.partialorder %v118, 8.507059e+37
    %v120 = vand.u32 %v108, 2147483648
    %v121 = vor.u32 1.1754944e-38, %v120
    %v122 = vsel %vm119, %v121, %v117
    %s123 = vtos %v122
    %s124 = smul.f32 %s97, %s123
    %vm125 = vcmp.eq.s32.totalorder %v45, 0
    %v126 = vstv %s124
    %v127 = vsel %vm125, %v126, 0.0
    %v128 = vadd.f32 %v127, 0.0
    %s129 = scalar_lea.vmem [#allocation2], 8
    %v130 = vld [vmem:[%s129] sm:$0xff]
    %s131 = scalar_lea.vmem [#allocation5], 1
    %v132 = vld [vmem:[%s131] sm:$0x1]
    %v133 = vperm.slane %v132, 0
    %vm134 = vcmp.eq.s32.totalorder %v49, %v133
    %v135 = vsel %vm134, 1, 0
    %v136 = vcvt.s32.f32 %v135
    %v137 = vsel %vm54, %v130, -inf
    %v138 = vrot.slane %v137, 4
    %v139 = vmax.f32 %v137, %v138
    %v140 = vrot.slane %v139, 2
    %v141 = vmax.f32 %v139, %v140
    %v142 = vrot.slane %v141, 1
    %v143 = vmax.f32 %v141, %v142
    %v144 = vsub.f32 %v130, %v143
    %v145 = vmul.f32 %v144, 1.442695
    %v146 = vpow.pop %v145
    %v147 = vsel %vm54, %v146, 0.0
    %v148 = vrot.slane %v147, 4
    %v149 = vadd.f32 %v147, %v148
    %v150 = vrot.slane %v149, 2
    %v151 = vadd.f32 %v149, %v150
    %v152 = vrot.slane %v151, 1
    %v153 = vadd.f32 %v151, %v152
    %v154 = vlog2.pop %v153
    %v155 = vmul.f32 %v154, 0.6931472
    %v156 = vadd.f32 %v143, %v155
    %v157 = vmul.f32 %v130, %v136
    %v158 = vsel %vm54, %v157, 0.0
    %v159 = vrot.slane %v158, 4
    %v160 = vadd.f32 %v158, %v159
    %v161 = vrot.slane %v160, 2
    %v162 = vadd.f32 %v160, %v161
    %v163 = vrot.slane %v162, 1
    %v164 = vadd.f32 %v162, %v163
    %vm165 = vcmp.eq.s32.totalorder %v132, 7
    %v166 = vsel %vm165, 0.1, 1.0
    %v167 = vsub.f32 %v156, %v164
    %v168 = vmul.f32 %v166, %v167
    %v169 = vsel %vm87, %v168, 0.0
    %170 = vadd.xlane.f32.xlu0 %v169
    %v171 = vpop.xlane.xlu0 %170
    %v172 = vrot.slane %v171, 4
    %v173 = vadd.f32 %v171, %v172
    %v174 = vrot.slane %v173, 2
    %v175 = vadd.f32 %v173, %v174
    %v176 = vrot.slane %v175, 1
    %v177 = vadd.f32 %v175, %v176
    %s178 = vtos %v177
    %v179 = vsel %vm87, %v166, 0.0
    %180 = vadd.xlane.f32.xlu0 %v179
    %v181 = vpop.xlane.xlu0 %180
    %v182 = vrot.slane %v181, 4
    %v183 = vadd.f32 %v181, %v182
    %v184 = vrot.slane %v183, 2
    %v185 = vadd.f32 %v183, %v184
    %v186 = vrot.slane %v185, 1
    %v187 = vadd.f32 %v185, %v186
    %s188 = vtos %v187
    %v189 = vstv %s188
    %v190 = vrcp.pop %v189
    %v191 = vmul.f32 %v189, %v190
    %v192 = vsub.f32 1.0, %v191
    %v193 = vmul.f32 %v190, %v192
    %v194 = vadd.f32 %v190, %v193
    %vm195 = vweird.f32 %v189
    %vm196 = vweird.f32 %v190
    %vm197 = vmor %vm195, %vm196
    %v198 = vsel %vm197, %v190, %v194
    %v199 = vand.u32 2147483647, %v189
    %vm200 = vcmp.eq.f32.partialorder %v199, 8.507059e+37
    %v201 = vand.u32 %v189, 2147483648
    %v202 = vor.u32 1.1754944e-38, %v201
    %v203 = vsel %vm200, %v202, %v198
    %s204 = vtos %v203
    %s205 = smul.f32 %s178, %s204
    %vm206 = vcmp.eq.s32.totalorder %v45, 1
    %v207 = vstv %s205
    %v208 = vsel %vm206, %v207, 0.0
    %v209 = vadd.f32 %v128, %v208
    %s210 = scalar_lea.vmem [#allocation2], 16
    %v211 = vld [vmem:[%s210] sm:$0xff]
    %s212 = scalar_lea.vmem [#allocation5], 2
    %v213 = vld [vmem:[%s212] sm:$0x1]
    %v214 = vperm.slane %v213, 0
    %vm215 = vcmp.eq.s32.totalorder %v49, %v214
    %v216 = vsel %vm215, 1, 0
    %v217 = vcvt.s32.f32 %v216
    %v218 = vsel %vm54, %v211, -inf
    %v219 = vrot.slane %v218, 4
    %v220 = vmax.f32 %v218, %v219
    %v221 = vrot.slane %v220, 2
    %v222 = vmax.f32 %v220, %v221
    %v223 = vrot.slane %v222, 1
    %v224 = vmax.f32 %v222, %v223
    %v225 = vsub.f32 %v211, %v224
    %v226 = vmul.f32 %v225, 1.442695
    %v227 = vpow.pop %v226
    %v228 = vsel %vm54, %v227, 0.0
    %v229 = vrot.slane %v228, 4
    %v230 = vadd.f32 %v228, %v229
    %v231 = vrot.slane %v230, 2
    %v232 = vadd.f32 %v230, %v231
    %v233 = vrot.slane %v232, 1
    %v234 = vadd.f32 %v232, %v233
    %v235 = vlog2.pop %v234
    %v236 = vmul.f32 %v235, 0.6931472
    %v237 = vadd.f32 %v224, %v236
    %v238 = vmul.f32 %v211, %v217
    %v239 = vsel %vm54, %v238, 0.0
    %v240 = vrot.slane %v239, 4
    %v241 = vadd.f32 %v239, %v240
    %v242 = vrot.slane %v241, 2
    %v243 = vadd.f32 %v241, %v242
    %v244 = vrot.slane %v243, 1
    %v245 = vadd.f32 %v243, %v244
    %vm246 = vcmp.eq.s32.totalorder %v213, 7
    %v247 = vsel %vm246, 0.1, 1.0
    %v248 = vsub.f32 %v237, %v245
    %v249 = vmul.f32 %v247, %v248
    %v250 = vsel %vm87, %v249, 0.0
    %251 = vadd.xlane.f32.xlu0 %v250
    %v252 = vpop.xlane.xlu0 %251
    %v253 = vrot.slane %v252, 4
    %v254 = vadd.f32 %v252, %v253
    %v255 = vrot.slane %v254, 2
    %v256 = vadd.f32 %v254, %v255
    %v257 = vrot.slane %v256, 1
    %v258 = vadd.f32 %v256, %v257
    %s259 = vtos %v258
    %v260 = vsel %vm87, %v247, 0.0
    %261 = vadd.xlane.f32.xlu0 %v260
    %v262 = vpop.xlane.xlu0 %261
    %v263 = vrot.slane %v262, 4
    %v264 = vadd.f32 %v262, %v263
    %v265 = vrot.slane %v264, 2
    %v266 = vadd.f32 %v264, %v265
    %v267 = vrot.slane %v266, 1
    %v268 = vadd.f32 %v266, %v267
    %s269 = vtos %v268
    %v270 = vstv %s269
    %v271 = vrcp.pop %v270
    %v272 = vmul.f32 %v270, %v271
    %v273 = vsub.f32 1.0, %v272
    %v274 = vmul.f32 %v271, %v273
    %v275 = vadd.f32 %v271, %v274
    %vm276 = vweird.f32 %v270
    %vm277 = vweird.f32 %v271
    %vm278 = vmor %vm276, %vm277
    %v279 = vsel %vm278, %v271, %v275
    %v280 = vand.u32 2147483647, %v270
    %vm281 = vcmp.eq.f32.partialorder %v280, 8.507059e+37
    %v282 = vand.u32 %v270, 2147483648
    %v283 = vor.u32 1.1754944e-38, %v282
    %v284 = vsel %vm281, %v283, %v279
    %s285 = vtos %v284
    %s286 = smul.f32 %s259, %s285
    %vm287 = vcmp.eq.s32.totalorder %v45, 2
    %v288 = vstv %s286
    %v289 = vsel %vm287, %v288, 0.0
    %v290 = vadd.f32 %v209, %v289
    %vm291 = vcmask 16384
    %292 = vst.msk [vmem:[#allocation7] sm:$0x1] %vm291, %v290
    // Predicated region
    $region18: #{tpu_custom_call.1} parent=1 // pred_check
      _
    $region19: #{tpu_custom_call.1} parent=1 // pred_check_branch
      %294 = sbr.rel (0) target = $region21
    $region20: #{tpu_custom_call.1} parent=1 // pred_region
      %296 = vsyncadd [#allocation4], 0
      %s298 = sshll.u32 [#allocation7], 4
      %s299 = int_to_ptr.vmem [resolvable:$true] %s298
      %s300 = sshll.u32 %s2, 4
      %s301 = int_to_ptr.hbm [resolvable:$true] %s300
      %303 = dma.vmem_to_hbm [thread:$0]  %s299, 16, %s301, [#allocation4]
    $region21: #{tpu_custom_call.1} parent=1 // pred_fallthru
      _
    // Predicated region
    $region22: #{tpu_custom_call.1} parent=1 // pred_check
      _
    $region23: #{tpu_custom_call.1} parent=1 // pred_check_branch
      %305 = sbr.rel (0) target = $region25
    $region24: #{tpu_custom_call.1} parent=1 // pred_region
      %307 = dma.done [#allocation4], 16
    $region25: #{tpu_custom_call.1} parent=1 // pred_fallthru
      _
    %308 = vsyncpa [#allocation3], 1
    %309 = vsyncpa [#allocation6], 1
    %310 = vsyncpa [#allocation4], 1

</llo_original>
